<compile_context>
chip_gen: v7x
topology: tpu7x:2x2x1
jax: 0.10.0
libtpu: 0.0.40
codegen_flags: <defaults>
</compile_context>

<pallas_src>
import functools

import jax
import jax.numpy as jnp
from jax.experimental import pallas as pl
from jax.experimental.pallas import tpu as pltpu


_TEMP_F32_BYTES_PER_ELEM = 24  # ~6 live full-tile f32 temporaries inside the kernel


def _round_up(x, m):
    return ((x + m - 1) // m) * m


def _vmem_capacity_bytes():
    try:
        cap = int(pltpu.get_tpu_info().vmem_capacity_bytes)
        if cap > 0:
            return cap
    except Exception:
        pass
    return 64 * 1024 * 1024  # conservative fallback (v7x per-TC)


def _pick_block_b(batch, channels, itemsize, vmem_budget_bytes):
    # Real per-row footprint: 2 logit streams x 2 pipeline buffers of the
    # input dtype, plus the f32 temporaries the kernel keeps live.
    bytes_per_row = channels * (4 * itemsize + _TEMP_F32_BYTES_PER_ELEM)
    tb = vmem_budget_bytes // max(1, bytes_per_row)
    tb = max(8, min(2048, tb))
    tb = (tb // 8) * 8
    tb = min(tb, _round_up(batch, 8))
    tb = max(8, tb)
    # Prefer a TB that divides B exactly (avoids the ragged-tail masking path).
    if batch % tb != 0 and tb < batch:
        for cand in range(tb, max(8, tb // 2) - 1, -8):
            if batch % cand == 0:
                tb = cand
                break
    return tb


def _vmem_limit_bytes(tb, c, itemsize, capacity):
    inputs = 2 * 2 * tb * c * itemsize            # 2 streams x double buffer
    temps = tb * c * _TEMP_F32_BYTES_PER_ELEM     # live full-tile f32 temporaries
    misc = 2 * (8 * tb * 4) + 2 * (8 * 128 * 4) + (2 << 20)  # labels/out + slack
    limit = max(inputs + temps + misc, 16 * 1024 * 1024)
    return int(min(limit, int(0.9 * capacity)))


def _avt_kd_block_kernel(s_ref, t_ref, lab_ref, out_ref, *, tau, true_b, ragged):
    """Partial CE / KL sums for one batch tile.

    out_ref is a (1, 8, 128) f32 tile:
      [0, 0, 0] = sum over valid rows of per-row cross-entropy
      [0, 0, 1] = sum over valid rows of per-row KL term
      all other entries = 0
    """
    s = s_ref[...].astype(jnp.float32)        # (TB, C) student logits
    t = t_ref[...].astype(jnp.float32)        # (TB, C) teacher logits
    labels = lab_ref[...]                     # (TB, 1) int32 class ids
    tb, c = s.shape

    if ragged:
        # Last block reads past the batch end: neutralize garbage rows before
        # any max/exp so NaN/Inf can never leak into the partial sums.
        i = pl.program_id(0)
        row_ids = jax.lax.broadcasted_iota(jnp.int32, (tb, 1), 0) + i * tb
        valid_col = row_ids < true_b                       # (TB, 1) bool
        s = jnp.where(valid_col, s, 0.0)
        t = jnp.where(valid_col, t, 0.0)

    # ---- cross entropy per row:  lse + max - s[label]  (no log_probs tile)
    s_max = jnp.max(s, axis=1, keepdims=True)
    s_shift = s - s_max
    exp_s = jnp.exp(s_shift)
    sum_exp_s = jnp.sum(exp_s, axis=1, keepdims=True)
    lse = jnp.log(sum_exp_s)                                  # (TB, 1)
    cls_ids = jax.lax.broadcasted_iota(jnp.int32, (tb, c), 1)
    s_at_label = jnp.sum(jnp.where(cls_ids == labels, s, 0.0),
                         axis=1, keepdims=True)               # (TB, 1)
    ce_row = lse + s_max - s_at_label                         # (TB, 1)

    # ---- student probs softmax(s / tau): reuse row max (and exp when tau==1)
    if tau == 1.0:  # trace-time specialization: tau is a Python float
        sp = exp_s * pl.reciprocal(sum_exp_s, approx=True)
    else:
        inv_tau = jnp.float32(1.0 / tau)
        s2_shift = s_shift * inv_tau          # max(s/tau) == s_max/tau, reuse
        exp_s2 = jnp.exp(s2_shift)
        sum_exp_s2 = jnp.sum(exp_s2, axis=1, keepdims=True)
        sp = exp_s2 * pl.reciprocal(sum_exp_s2, approx=True)

    # ---- teacher term, folded so log_tp / tp tiles are never materialized:
    #   sum(tp*(log(tp) - sp)) = (1/Z)*sum(exp_t2*(t2_shift - sp)) - log(Z)
    #   with Z = sum(exp_t2).  Identical math (row-scalar terms reassociated);
    #   exp_t2 underflow -> 0 * finite = 0, so no NaN hazard.
    t_max = jnp.max(t, axis=1, keepdims=True)
    if tau == 1.0:
        t2_shift = t - t_max
    else:
        t2_shift = (t - t_max) * jnp.float32(1.0 / tau)
    exp_t2 = jnp.exp(t2_shift)
    sum_exp_t2 = jnp.sum(exp_t2, axis=1, keepdims=True)       # (TB, 1)
    inner = jnp.sum(exp_t2 * (t2_shift - sp), axis=1, keepdims=True)
    kl_row = inner * pl.reciprocal(sum_exp_t2) - jnp.log(sum_exp_t2)

    # TPU perf note: on v7x (VALU-bound) the axis=1 reductions could ride the
    # idle MXU via a ones-column matmul, but bf16 ingestion precision for the
    # exp terms would need validation, so we keep the VPU reductions.

    if ragged:
        valid = valid_col.astype(jnp.float32)
        task_sum = jnp.sum(valid * ce_row)
        kl_sum = jnp.sum(valid * kl_row)
    else:
        task_sum = jnp.sum(ce_row)
        kl_sum = jnp.sum(kl_row)

    sub = jax.lax.broadcasted_iota(jnp.int32, (1, 8, 128), 1)
    lane = jax.lax.broadcasted_iota(jnp.int32, (1, 8, 128), 2)
    out_ref[...] = jnp.where(
        (sub == 0) & (lane == 0), task_sum,
        jnp.where((sub == 0) & (lane == 1), kl_sum, 0.0),
    ).astype(jnp.float32)


def avt_kd_loss(student_logits, teacher_logits, labels,
                temperature=1.0, alpha=1.0, beta=1.0, block_b=None):
    """AVT_KD loss.  Inputs may be f32 or bf16 (bf16 halves HBM traffic;
    the kernel upcasts each tile to f32).  `temperature`/`alpha`/`beta`
    must be concrete Python numbers."""
    b, c = student_logits.shape
    itemsize = jnp.dtype(student_logits.dtype).itemsize
    capacity = _vmem_capacity_bytes()
    budget = int(0.45 * capacity)
    tb = block_b if block_b is not None else _pick_block_b(b, c, itemsize, budget)
    tb = max(8, (tb // 8) * 8)
    num_blocks = pl.cdiv(b, tb)
    ragged = (num_blocks * tb) != b   # handled in-kernel; no jnp.pad of logits

    labels_i32 = labels.astype(jnp.int32).reshape(b, 1)

    kernel = functools.partial(
        _avt_kd_block_kernel, tau=float(temperature), true_b=b, ragged=ragged
    )

    partials = pl.pallas_call(
        kernel,
        out_shape=jax.ShapeDtypeStruct((num_blocks, 8, 128), jnp.float32),
        grid_spec=pltpu.PrefetchScalarGridSpec(
            num_scalar_prefetch=0,
            grid=(num_blocks,),
            in_specs=[
                pl.BlockSpec((tb, c), lambda i: (i, 0)),   # student logits
                pl.BlockSpec((tb, c), lambda i: (i, 0)),   # teacher logits
                pl.BlockSpec((tb, 1), lambda i: (i, 0)),   # labels column
            ],
            out_specs=pl.BlockSpec((1, 8, 128), lambda i: (i, 0, 0)),
        ),
        compiler_params=pltpu.CompilerParams(
            dimension_semantics=("parallel",),
            vmem_limit_bytes=_vmem_limit_bytes(tb, c, itemsize, capacity)),
    )(student_logits, teacher_logits, labels_i32)

    # Tiny final reduction + combine in plain JAX.
    task_total = jnp.sum(partials[:, 0, 0])
    kl_total = jnp.sum(partials[:, 0, 1])
    inv_b = jnp.float32(1.0 / b)
    tau = float(temperature)
    return (jnp.float32(alpha) * task_total * inv_b
            + jnp.float32(beta) * kl_total * inv_b * jnp.float32(tau * tau))


def _reference(student_logits, teacher_logits, labels,
               temperature=1.0, alpha=1.0, beta=1.0):
    # pure-JAX reference mirroring the PyTorch module semantics
    s = student_logits.astype(jnp.float32)
    t = teacher_logits.astype(jnp.float32)
    b, _ = s.shape
    log_probs = jax.nn.log_softmax(s, axis=1)
    ce = -jnp.mean(log_probs[jnp.arange(b), labels])
    sp = jax.nn.softmax(s / temperature, axis=1)
    tp = jax.nn.softmax(t / temperature, axis=1)
    kl = jnp.sum(tp * (jnp.log(tp) - sp)) / b * temperature ** 2
    return alpha * ce + beta * kl


if __name__ == "__main__":
    key = jax.random.PRNGKey(0)
    k1, k2, k3 = jax.random.split(key, 3)

    B, C = 8, 32
    student_logits = jax.random.normal(k1, (B, C), dtype=jnp.float32)
    teacher_logits = jax.random.normal(k2, (B, C), dtype=jnp.float32)
    labels = jax.random.randint(k3, (B,), 0, C, dtype=jnp.int32)

    # tolerance loosened slightly vs exact math because the student softmax
    # denominator uses the EUP approximate reciprocal.
    for tau, alpha, beta in [(1.0, 1.0, 1.0), (2.0, 0.7, 0.3)]:
        loss = avt_kd_loss(student_logits, teacher_logits, labels,
                           temperature=tau, alpha=alpha, beta=beta)
        loss = jax.block_until_ready(loss)
        ref = _reference(student_logits, teacher_logits, labels,
                         temperature=tau, alpha=alpha, beta=beta)
        assert jnp.allclose(loss, ref, rtol=2e-3, atol=2e-3), (tau, loss, ref)

    # Ragged batch: exercises the in-kernel tail mask (no wrapper-side pad).
    B2 = 12
    s2 = jax.random.normal(k1, (B2, C), dtype=jnp.float32)
    t2 = jax.random.normal(k2, (B2, C), dtype=jnp.float32)
    lab2 = jax.random.randint(k3, (B2,), 0, C, dtype=jnp.int32)
    loss2 = jax.block_until_ready(
        avt_kd_loss(s2, t2, lab2, temperature=2.0, block_b=8))
    ref2 = _reference(s2, t2, lab2, temperature=2.0)
    assert jnp.allclose(loss2, ref2, rtol=2e-3, atol=2e-3), (loss2, ref2)

    # bf16 streaming: kernel upcasts per tile; reference uses the same
    # bf16-quantized inputs so only the approx-reciprocal error remains.
    s3 = student_logits.astype(jnp.bfloat16)
    t3 = teacher_logits.astype(jnp.bfloat16)
    loss3 = jax.block_until_ready(avt_kd_loss(s3, t3, labels, temperature=1.0))
    ref3 = _reference(s3.astype(jnp.float32), t3.astype(jnp.float32),
                      labels, temperature=1.0)
    assert jnp.allclose(loss3, ref3, rtol=5e-3, atol=5e-3), (loss3, ref3)

    print("KERNEL_OK")
</pallas_src>

<mosaic_0001>
module attributes {stable_mosaic.version = 11 : i64} {
  func.func @_avt_kd_block_kernel(%arg0: i32, %arg1: memref<8x32xf32, #tpu.memory_space<vmem>>, %arg2: memref<8x32xf32, #tpu.memory_space<vmem>>, %arg3: memref<8x1xi32, #tpu.memory_space<vmem>>, %arg4: memref<1x8x128xf32, #tpu.memory_space<vmem>>) attributes {dimension_semantics = [#tpu.dimension_semantics<parallel>], iteration_bounds = array<i64: 1>, scalar_prefetch = 0 : i64, scratch_operands = 0 : i64, tpu.core_type = #tpu.core_type<tc>, window_params = [{transform_indices = @transform_0, window_bounds = array<i64: 8, 32>}, {transform_indices = @transform_1, window_bounds = array<i64: 8, 32>}, {transform_indices = @transform_2, window_bounds = array<i64: 8, 1>}, {transform_indices = @transform_3, window_bounds = array<i64: 1, 8, 128>}]} {
    %c0 = arith.constant 0 : index
    %c0_0 = arith.constant 0 : index
    %0 = vector.load %arg1[%c0, %c0_0] : memref<8x32xf32, #tpu.memory_space<vmem>>, vector<8x32xf32>
    %c0_1 = arith.constant 0 : index
    %c0_2 = arith.constant 0 : index
    %1 = vector.load %arg2[%c0_1, %c0_2] : memref<8x32xf32, #tpu.memory_space<vmem>>, vector<8x32xf32>
    %c0_3 = arith.constant 0 : index
    %c0_4 = arith.constant 0 : index
    %2 = vector.load %arg3[%c0_3, %c0_4] : memref<8x1xi32, #tpu.memory_space<vmem>>, vector<8x1xi32>
    %cst = arith.constant dense<0xFF800000> : vector<8xf32>
    %3 = vector.multi_reduction <maximumf>, %0, %cst [1] : vector<8x32xf32> to vector<8xf32>
    %4 = vector.shape_cast %3 : vector<8xf32> to vector<8x1xf32>
    %5 = vector.broadcast %4 : vector<8x1xf32> to vector<8x32xf32>
    %6 = arith.subf %0, %5 : vector<8x32xf32>
    %7 = math.exp %6 : vector<8x32xf32>
    %cst_5 = arith.constant dense<0.000000e+00> : vector<8xf32>
    %8 = vector.multi_reduction <add>, %7, %cst_5 [1] : vector<8x32xf32> to vector<8xf32>
    %9 = vector.shape_cast %8 : vector<8xf32> to vector<8x1xf32>
    %10 = math.log %9 : vector<8x1xf32>
    %11 = tpu.iota {dimensions = array<i32: 1>} : vector<8x32xi32>
    %12 = vector.broadcast %2 : vector<8x1xi32> to vector<8x32xi32>
    %13 = arith.cmpi eq, %11, %12 : vector<8x32xi32>
    %cst_6 = arith.constant 0.000000e+00 : f32
    %14 = vector.broadcast %cst_6 : f32 to vector<8x32xf32>
    %15 = arith.select %13, %0, %14 : vector<8x32xi1>, vector<8x32xf32>
    %cst_7 = arith.constant dense<0.000000e+00> : vector<8xf32>
    %16 = vector.multi_reduction <add>, %15, %cst_7 [1] : vector<8x32xf32> to vector<8xf32>
    %17 = vector.shape_cast %16 : vector<8xf32> to vector<8x1xf32>
    %18 = arith.addf %10, %4 : vector<8x1xf32>
    %19 = arith.subf %18, %17 : vector<8x1xf32>
    %20 = tpu.reciprocal %9 {approx = true} : vector<8x1xf32> -> vector<8x1xf32>
    %21 = vector.broadcast %20 : vector<8x1xf32> to vector<8x32xf32>
    %22 = arith.mulf %7, %21 : vector<8x32xf32>
    %cst_8 = arith.constant dense<0xFF800000> : vector<8xf32>
    %23 = vector.multi_reduction <maximumf>, %1, %cst_8 [1] : vector<8x32xf32> to vector<8xf32>
    %24 = vector.shape_cast %23 : vector<8xf32> to vector<8x1xf32>
    %25 = vector.broadcast %24 : vector<8x1xf32> to vector<8x32xf32>
    %26 = arith.subf %1, %25 : vector<8x32xf32>
    %27 = math.exp %26 : vector<8x32xf32>
    %cst_9 = arith.constant dense<0.000000e+00> : vector<8xf32>
    %28 = vector.multi_reduction <add>, %27, %cst_9 [1] : vector<8x32xf32> to vector<8xf32>
    %29 = vector.shape_cast %28 : vector<8xf32> to vector<8x1xf32>
    %30 = arith.subf %26, %22 : vector<8x32xf32>
    %31 = arith.mulf %27, %30 : vector<8x32xf32>
    %cst_10 = arith.constant dense<0.000000e+00> : vector<8xf32>
    %32 = vector.multi_reduction <add>, %31, %cst_10 [1] : vector<8x32xf32> to vector<8xf32>
    %33 = vector.shape_cast %32 : vector<8xf32> to vector<8x1xf32>
    %34 = tpu.reciprocal %29 : vector<8x1xf32> -> vector<8x1xf32>
    %35 = arith.mulf %33, %34 : vector<8x1xf32>
    %36 = math.log %29 : vector<8x1xf32>
    %37 = arith.subf %35, %36 : vector<8x1xf32>
    %38 = vector.shape_cast %19 : vector<8x1xf32> to vector<1x8x1xf32>
    %cst_11 = arith.constant dense<0.000000e+00> : vector<1xf32>
    %39 = vector.multi_reduction <add>, %38, %cst_11 [1, 2] : vector<1x8x1xf32> to vector<1xf32>
    %40 = vector.shape_cast %39 : vector<1xf32> to vector<1x1x1xf32>
    %41 = vector.extract %40[0, 0, 0] : f32 from vector<1x1x1xf32>
    %42 = vector.shape_cast %37 : vector<8x1xf32> to vector<1x8x1xf32>
    %cst_12 = arith.constant dense<0.000000e+00> : vector<1xf32>
    %43 = vector.multi_reduction <add>, %42, %cst_12 [1, 2] : vector<1x8x1xf32> to vector<1xf32>
    %44 = vector.shape_cast %43 : vector<1xf32> to vector<1x1x1xf32>
    %45 = vector.extract %44[0, 0, 0] : f32 from vector<1x1x1xf32>
    %46 = tpu.iota {dimensions = array<i32: 1>} : vector<1x8x128xi32>
    %47 = tpu.iota {dimensions = array<i32: 2>} : vector<1x8x128xi32>
    %c0_i32 = arith.constant 0 : i32
    %48 = vector.broadcast %c0_i32 : i32 to vector<1x8x128xi32>
    %49 = arith.cmpi eq, %46, %48 : vector<1x8x128xi32>
    %c0_i32_13 = arith.constant 0 : i32
    %50 = vector.broadcast %c0_i32_13 : i32 to vector<1x8x128xi32>
    %51 = arith.cmpi eq, %47, %50 : vector<1x8x128xi32>
    %52 = arith.andi %49, %51 : vector<1x8x128xi1>
    %c0_i32_14 = arith.constant 0 : i32
    %53 = vector.broadcast %c0_i32_14 : i32 to vector<1x8x128xi32>
    %54 = arith.cmpi eq, %46, %53 : vector<1x8x128xi32>
    %c1_i32 = arith.constant 1 : i32
    %55 = vector.broadcast %c1_i32 : i32 to vector<1x8x128xi32>
    %56 = arith.cmpi eq, %47, %55 : vector<1x8x128xi32>
    %57 = arith.andi %54, %56 : vector<1x8x128xi1>
    %cst_15 = arith.constant 0.000000e+00 : f32
    %58 = vector.broadcast %45 : f32 to vector<1x8x128xf32>
    %59 = vector.broadcast %cst_15 : f32 to vector<1x8x128xf32>
    %60 = arith.select %57, %58, %59 : vector<1x8x128xi1>, vector<1x8x128xf32>
    %61 = vector.broadcast %41 : f32 to vector<1x8x128xf32>
    %62 = arith.select %52, %61, %60 : vector<1x8x128xi1>, vector<1x8x128xf32>
    %c0_16 = arith.constant 0 : index
    %c0_17 = arith.constant 0 : index
    %c0_18 = arith.constant 0 : index
    %63 = vector.load %arg4[%c0_16, %c0_17, %c0_18] : memref<1x8x128xf32, #tpu.memory_space<vmem>>, vector<1x8x128xf32>
    tpu.vector_store %arg4[%c0_16, %c0_17, %c0_18], %62 {strides = array<i32>} : memref<1x8x128xf32, #tpu.memory_space<vmem>>, vector<1x8x128xf32>,
    return
  }
  func.func @transform_0(%arg0: i32) -> (i32, i32) {
    %c0_i32 = arith.constant 0 : i32
    %c0_i32_0 = arith.constant 0 : i32
    return %arg0, %c0_i32 : i32, i32
  }
  func.func @transform_1(%arg0: i32) -> (i32, i32) {
    %c0_i32 = arith.constant 0 : i32
    %c0_i32_0 = arith.constant 0 : i32
    return %arg0, %c0_i32 : i32, i32
  }
  func.func @transform_2(%arg0: i32) -> (i32, i32) {
    %c0_i32 = arith.constant 0 : i32
    %c0_i32_0 = arith.constant 0 : i32
    return %arg0, %c0_i32 : i32, i32
  }
  func.func @transform_3(%arg0: i32) -> (i32, i32, i32) {
    %c0_i32 = arith.constant 0 : i32
    %c0_i32_0 = arith.constant 0 : i32
    %c0_i32_1 = arith.constant 0 : i32
    return %arg0, %c0_i32, %c0_i32_0 : i32, i32, i32
  }
}

</mosaic_0001>

<llo_original>
// kernel: tpu_custom_call.1
$region0: #{tpu_custom_call.1}
  #allocation0 [shape = 'u32[]', space=smem, size = 0x4, offset = 0x4, fixed_abs, tag = 'smem constant byte address 0x4 - core index']
  #allocation1 [shape = 'u32[144,128]{1,0:T(1,128)}', space=vmem, size = 0x12000, scoped, tag = 'internal scratch']
  %s0 = inlined_call_operand.vmem [shape: f32[8,32], index: 0, kind: input, shape index: {}]
  %s1 = inlined_call_operand.hbm [shape: f32[8,32], index: 1, kind: input, shape index: {}]
  %s2 = inlined_call_operand.vmem [shape: s32[8,1], index: 2, kind: input, shape index: {}]
  %s3 = inlined_call_operand.hbm [shape: f32[1,8,128], index: 3, kind: output, shape index: {}]
  %s4 = sld [smem:[#allocation0]]
  $region26: #{tpu_custom_call.1} parent=0
    _
  %s6 = ssub.s32 1, %s4
  %s7 = scalar_select 0, %s6, %s4
  $region1: #{tpu_custom_call.1} parent=0
    #allocation2 [shape = 'u8[4096]{0}', space=vmem, size = 0x1000, scoped, tag = 'input window, operand 1, single buffered']
    #allocation3 [shape = 's32[1]{0}', space=sflag, size = 0x4, scoped, tag = 'scoped memory for tpu_custom_call.1']
    #allocation4 [shape = 's32[1]{0}', space=sflag, size = 0x4, scoped, tag = 'scoped memory for tpu_custom_call.1']
    #allocation5 [shape = 'u8[4096]{0}', space=vmem, size = 0x1000, scoped, tag = 'output window, operand 0, single buffered']
    %8 = vsyncpa [#allocation3], 0
    %9 = vsyncpa [#allocation4], 0
    // Predicated region
    $region2: #{tpu_custom_call.1} parent=1 // pred_check
      _
    $region3: #{tpu_custom_call.1} parent=1 // pred_check_branch
      %11 = sbr.rel (0) target = $region5
    $region4: #{tpu_custom_call.1} parent=1 // pred_region
      _
    $region5: #{tpu_custom_call.1} parent=1 // pred_fallthru
      _
    // Predicated region
    $region6: #{tpu_custom_call.1} parent=1 // pred_check
      _
    $region7: #{tpu_custom_call.1} parent=1 // pred_check_branch
      %13 = sbr.rel (0) target = $region9
    $region8: #{tpu_custom_call.1} parent=1 // pred_region
      %s15 = ssub.s32 128, 128
      %16 = vsyncadd [#allocation3], %s15
      %s18 = sshll.u32 [#allocation2], 4
      %s19 = int_to_ptr.vmem [resolvable:$true] %s18
      %21 = dma.hbm_to_vmem [thread:$0]  %s1, 128, %s19, [#allocation3]
    $region9: #{tpu_custom_call.1} parent=1 // pred_fallthru
      _
    // Predicated region
    $region10: #{tpu_custom_call.1} parent=1 // pred_check
      _
    $region11: #{tpu_custom_call.1} parent=1 // pred_check_branch
      %23 = sbr.rel (0) target = $region13
    $region12: #{tpu_custom_call.1} parent=1 // pred_region
      _
    $region13: #{tpu_custom_call.1} parent=1 // pred_fallthru
      _
    // Predicated region
    $region14: #{tpu_custom_call.1} parent=1 // pred_check
      _
    $region15: #{tpu_custom_call.1} parent=1 // pred_check_branch
      %25 = sbr.rel (0) target = $region17
    $region16: #{tpu_custom_call.1} parent=1 // pred_region
      %26 = dma.done [#allocation3], 128
    $region17: #{tpu_custom_call.1} parent=1 // pred_fallthru
      _
    %v27 = vld [vmem:[%s0] sm:$0xff]
    %v28 = vld [vmem:[#allocation2] sm:$0xff]
    %v29 = vld [vmem:[%s2] sm:$0xff]
    %vm30 = vcmask 261120
    %v31 = vsel %vm30, %v27, -inf
    %32 = vmax.xlane.f32.xlu0 %v31
    %v33 = vpop.xlane.xlu0 %32
    %v34 = vsub.f32 %v27, %v33
    %v35 = vmul.f32 %v34, 1.442695
    %v36 = vpow.pop %v35
    %v37 = vsel %vm30, %v36, 0.0
    %38 = vadd.xlane.f32.xlu0 %v37
    %v39 = vpop.xlane.xlu0 %38
    %v40 = vlog2.pop %v39
    %v41 = vmul.f32 %v40, 0.6931472
    %v42 = vlaneseq
    %v43 = vand.u32 %v42, 127
    %44 = vset.pattern.permute.xlu0 0
    %45 = vperm.xlu0 %44, %v29
    %v46 = vpop.permute.xlu0 %45
    %vm47 = vcmp.eq.s32.totalorder %v43, %v46
    %v48 = vsel %vm47, %v27, 0.0
    %v49 = vsel %vm30, %v48, 0.0
    %50 = vadd.xlane.f32.xlu0 %v49
    %v51 = vpop.xlane.xlu0 %50
    %v52 = vadd.f32 %v41, %v33
    %v53 = vsub.f32 %v52, %v51
    %v54 = vrcp.pop %v39
    %v55 = vmul.f32 %v36, %v54
    %v56 = vsel %vm30, %v28, -inf
    %57 = vmax.xlane.f32.xlu0 %v56
    %v58 = vpop.xlane.xlu0 %57
    %v59 = vsub.f32 %v28, %v58
    %v60 = vmul.f32 %v59, 1.442695
    %v61 = vpow.pop %v60
    %v62 = vsel %vm30, %v61, 0.0
    %63 = vadd.xlane.f32.xlu0 %v62
    %v64 = vpop.xlane.xlu0 %63
    %v65 = vsub.f32 %v59, %v55
    %v66 = vmul.f32 %v61, %v65
    %v67 = vsel %vm30, %v66, 0.0
    %68 = vadd.xlane.f32.xlu0 %v67
    %v69 = vpop.xlane.xlu0 %68
    %v70 = vrcp.pop %v64
    %v71 = vmul.f32 %v69, %v70
    %v72 = vlog2.pop %v64
    %v73 = vmul.f32 %v72, 0.6931472
    %v74 = vsub.f32 %v71, %v73
    %vm75 = vcmask 7168
    %v76 = vsel %vm75, %v53, 0.0
    %77 = vadd.xlane.f32.xlu0 %v76
    %v78 = vpop.xlane.xlu0 %77
    %v79 = vrot.slane %v78, 4
    %v80 = vadd.f32 %v78, %v79
    %v81 = vrot.slane %v80, 2
    %v82 = vadd.f32 %v80, %v81
    %v83 = vrot.slane %v82, 1
    %v84 = vadd.f32 %v82, %v83
    %s85 = vtos %v84
    %v86 = vsel %vm75, %v74, 0.0
    %87 = vadd.xlane.f32.xlu0 %v86
    %v88 = vpop.xlane.xlu0 %87
    %v89 = vrot.slane %v88, 4
    %v90 = vadd.f32 %v88, %v89
    %v91 = vrot.slane %v90, 2
    %v92 = vadd.f32 %v90, %v91
    %v93 = vrot.slane %v92, 1
    %v94 = vadd.f32 %v92, %v93
    %s95 = vtos %v94
    %v96 = vlaneseq
    %v97 = vshrl.u32 %v96, 7
    %vm98 = vcmp.eq.s32.totalorder %v97, 0
    %vm99 = vcmp.eq.s32.totalorder %v43, 0
    %vm100 = vmand %vm98, %vm99
    %vm101 = vcmp.eq.s32.totalorder %v43, 1
    %vm102 = vmand %vm98, %vm101
    %v103 = vstv %s95
    %v104 = vsel %vm102, %v103, 0.0
    %v105 = vstv %s85
    %v106 = vsel %vm100, %v105, %v104
    %107 = vst [vmem:[#allocation5] sm:$0xff] %v106
    // Predicated region
    $region18: #{tpu_custom_call.1} parent=1 // pred_check
      _
    $region19: #{tpu_custom_call.1} parent=1 // pred_check_branch
      %109 = sbr.rel (0) target = $region21
    $region20: #{tpu_custom_call.1} parent=1 // pred_region
      %s111 = ssub.s32 128, 128
      %112 = vsyncadd [#allocation4], %s111
      %s114 = sshll.u32 [#allocation5], 4
      %s115 = int_to_ptr.vmem [resolvable:$true] %s114
      %117 = dma.vmem_to_hbm [thread:$0]  %s115, 128, %s3, [#allocation4]
    $region21: #{tpu_custom_call.1} parent=1 // pred_fallthru
      _
    // Predicated region
    $region22: #{tpu_custom_call.1} parent=1 // pred_check
      _
    $region23: #{tpu_custom_call.1} parent=1 // pred_check_branch
      %119 = sbr.rel (0) target = $region25
    $region24: #{tpu_custom_call.1} parent=1 // pred_region
      %120 = dma.done [#allocation4], 128
    $region25: #{tpu_custom_call.1} parent=1 // pred_fallthru
      _
    %121 = vsyncpa [#allocation3], 1
    %122 = vsyncpa [#allocation4], 1

</llo_original>
